<compile_context>
chip_gen: v5e
topology: v5e:2x2
jax: 0.10.0
libtpu: 0.0.40
codegen_flags: <defaults>
</compile_context>

<pallas_src>
import functools

import jax
import jax.numpy as jnp
from jax import lax
from jax.experimental import pallas as pl
from jax.experimental.pallas import tpu as pltpu


def _attention_kernel(nk_valid, nk_padded,
                      q_ref, k_ref, o_ref,
                      m_sc, l_sc, acc_sc):
    """One Nk-tile of flash-style attention pooling.

    q_ref: (1, D)   k_ref: (TILE_NK, D)   o_ref: (1, D)
    scratch: m_sc (1,1) running max, l_sc (1,1) running denom,
             acc_sc (1, D) running weighted sum -- all f32.
    """
    i = pl.program_id(0)

    @pl.when(i == 0)
    def _():
        m_sc[...] = jnp.full_like(m_sc, -jnp.inf)
        l_sc[...] = jnp.zeros_like(l_sc)
        acc_sc[...] = jnp.zeros_like(acc_sc)

    q = q_ref[...]                      # (1, D)  native dtype
    k = k_ref[...]                      # (T, D)  native dtype
    tile = k.shape[0]

    # Lane-dense scores: s = q @ k.T -> (1, T), contracting on D, f32 accumulate.
    s = lax.dot_general(q, k, (((1,), (1,)), ((), ())),
                        preferred_element_type=jnp.float32)

    if nk_valid != nk_padded:
        # Mask keys that only exist because Nk was padded up to the tile size.
        col = lax.broadcasted_iota(jnp.int32, s.shape, 1)
        s = jnp.where(i * tile + col < nk_valid, s, -jnp.inf)

    # Online softmax update over the key axis (last/lane axis of s).
    m_prev = m_sc[...]                                          # (1, 1)
    m_new = jnp.maximum(m_prev, jnp.max(s, axis=-1, keepdims=True))
    alpha = jnp.exp(m_prev - m_new)                             # rescale old state
    p = jnp.exp(s - m_new)                                      # (1, T) f32
    l_sc[...] = alpha * l_sc[...] + jnp.sum(p, axis=-1, keepdims=True)
    # Tile contribution on the MXU: (1, T) x (T, D) -> (1, D), f32 accumulate.
    acc_sc[...] = alpha * acc_sc[...] + jnp.dot(
        p.astype(k.dtype), k, preferred_element_type=jnp.float32)
    m_sc[...] = m_new

    @pl.when(i == pl.num_programs(0) - 1)
    def _():
        inv_l = pl.reciprocal(l_sc[...], approx=True)           # EUP divide
        o_ref[...] = (acc_sc[...] * inv_l).astype(o_ref.dtype)


def _round_up(x, m):
    return ((x + m - 1) // m) * m


def attention_layer(query: jax.Array, key: jax.Array, *, tile_nk=None) -> jax.Array:
    """query: (1, D), key: (Nk, D)  ->  (1, D) attention-pooled context."""
    nq, d = query.shape
    nk, dk = key.shape
    assert d == dk and nq == 1, "reference module uses a single query row"

    # Pick the Nk tile: biggest multiple of 8 whose double-buffered key tile
    # stays under ~4 MiB (safe for every generation's scoped-VMEM default).
    if tile_nk is None:
        bytes_per_row = d * key.dtype.itemsize
        budget = 4 * 1024 * 1024
        max_tile = max(8, (budget // (2 * bytes_per_row)) // 8 * 8)
        tile_nk = min(_round_up(nk, 8), max_tile)
    else:
        tile_nk = _round_up(tile_nk, 8)

    nk_pad = _round_up(nk, tile_nk)
    if nk_pad != nk:
        key = jnp.pad(key, ((0, nk_pad - nk), (0, 0)))   # zero rows, masked in-kernel
    grid = (nk_pad // tile_nk,)

    kernel = functools.partial(_attention_kernel, nk, nk_pad)

    return pl.pallas_call(
        kernel,
        out_shape=jax.ShapeDtypeStruct((1, d), key.dtype),
        grid_spec=pltpu.PrefetchScalarGridSpec(
            num_scalar_prefetch=0,
            grid=grid,
            in_specs=[
                pl.BlockSpec((1, d), lambda i: (0, 0)),        # query: resident
                pl.BlockSpec((tile_nk, d), lambda i: (i, 0)),  # key: streamed tiles
            ],
            out_specs=pl.BlockSpec((1, d), lambda i: (0, 0)),  # output: resident
            scratch_shapes=[
                pltpu.VMEM((1, 1), jnp.float32),   # running max  m
                pltpu.VMEM((1, 1), jnp.float32),   # running sum  l
                pltpu.VMEM((1, d), jnp.float32),   # running weighted sum
            ],
        ),
        compiler_params=pltpu.CompilerParams(
            dimension_semantics=("arbitrary",),     # key axis is a reduction
        ),
    )(query, key)


def _reference(query, key):
    e = key @ query.T
    alpha = jax.nn.softmax(e, axis=0)
    c = jnp.sum(alpha * key, axis=0)
    return c[None, :]


if __name__ == "__main__":
    D = 32   # feature dim
    NK = 8   # number of keys

    k0, k1 = jax.random.split(jax.random.PRNGKey(0))
    query = jax.random.normal(k0, (1, D), dtype=jnp.float32)
    key = jax.random.normal(k1, (NK, D), dtype=jnp.float32)

    out = jax.block_until_ready(attention_layer(query, key))
    ref = _reference(query, key)
    assert out.shape == (1, D)
    assert jnp.allclose(out, ref, atol=2e-3, rtol=2e-3), "mismatch vs reference"

    # Exercise the multi-tile / padded / online-softmax path as well.
    k2, k3 = jax.random.split(jax.random.PRNGKey(1))
    NK2 = 40
    query2 = jax.random.normal(k2, (1, D), dtype=jnp.float32)
    key2 = jax.random.normal(k3, (NK2, D), dtype=jnp.float32)
    out2 = jax.block_until_ready(attention_layer(query2, key2, tile_nk=16))
    ref2 = _reference(query2, key2)
    assert jnp.allclose(out2, ref2, atol=2e-3, rtol=2e-3), "mismatch (tiled path)"

    print("KERNEL_OK")
</pallas_src>

<mosaic_0001>
module attributes {stable_mosaic.version = 11 : i64} {
  func.func @_attention_kernel(%arg0: i32, %arg1: memref<1x32xf32, #tpu.memory_space<vmem>>, %arg2: memref<8x32xf32, #tpu.memory_space<vmem>>, %arg3: memref<1x32xf32, #tpu.memory_space<vmem>>, %arg4: memref<1x1xf32, #tpu.memory_space<vmem>>, %arg5: memref<1x1xf32, #tpu.memory_space<vmem>>, %arg6: memref<1x32xf32, #tpu.memory_space<vmem>>) attributes {dimension_semantics = [#tpu.dimension_semantics<arbitrary>], iteration_bounds = array<i64: 1>, scalar_prefetch = 0 : i64, scratch_operands = 3 : i64, tpu.core_type = #tpu.core_type<tc>, window_params = [{pipeline_mode = #tpu.pipeline_mode<synchronous>, transform_indices = @transform_0, window_bounds = array<i64: 1, 32>}, {transform_indices = @transform_1, window_bounds = array<i64: 8, 32>}, {pipeline_mode = #tpu.pipeline_mode<synchronous>, transform_indices = @transform_2, window_bounds = array<i64: 1, 32>}]} {
    %c0_i32 = arith.constant 0 : i32
    %0 = arith.cmpi eq, %arg0, %c0_i32 : i32
    %1 = arith.extui %0 : i1 to i32
    %c0_i32_0 = arith.constant 0 : i32
    %2 = arith.cmpi ne, %1, %c0_i32_0 : i32
    scf.if %2 {
      %cst_21 = arith.constant 0xFF800000 : f32
      %31 = vector.broadcast %cst_21 : f32 to vector<1x1xf32>
      %c0_22 = arith.constant 0 : index
      %c0_23 = arith.constant 0 : index
      %32 = vector.load %arg4[%c0_22, %c0_23] : memref<1x1xf32, #tpu.memory_space<vmem>>, vector<1x1xf32>
      tpu.vector_store %arg4[%c0_22, %c0_23], %31 {strides = array<i32>} : memref<1x1xf32, #tpu.memory_space<vmem>>, vector<1x1xf32>,
      %cst_24 = arith.constant 0.000000e+00 : f32
      %33 = vector.broadcast %cst_24 : f32 to vector<1x1xf32>
      %c0_25 = arith.constant 0 : index
      %c0_26 = arith.constant 0 : index
      %34 = vector.load %arg5[%c0_25, %c0_26] : memref<1x1xf32, #tpu.memory_space<vmem>>, vector<1x1xf32>
      tpu.vector_store %arg5[%c0_25, %c0_26], %33 {strides = array<i32>} : memref<1x1xf32, #tpu.memory_space<vmem>>, vector<1x1xf32>,
      %cst_27 = arith.constant 0.000000e+00 : f32
      %35 = vector.broadcast %cst_27 : f32 to vector<1x32xf32>
      %c0_28 = arith.constant 0 : index
      %c0_29 = arith.constant 0 : index
      %36 = vector.load %arg6[%c0_28, %c0_29] : memref<1x32xf32, #tpu.memory_space<vmem>>, vector<1x32xf32>
      tpu.vector_store %arg6[%c0_28, %c0_29], %35 {strides = array<i32>} : memref<1x32xf32, #tpu.memory_space<vmem>>, vector<1x32xf32>,
    } else {
    }
    %c0 = arith.constant 0 : index
    %c0_1 = arith.constant 0 : index
    %3 = vector.load %arg1[%c0, %c0_1] : memref<1x32xf32, #tpu.memory_space<vmem>>, vector<1x32xf32>
    %c0_2 = arith.constant 0 : index
    %c0_3 = arith.constant 0 : index
    %4 = vector.load %arg2[%c0_2, %c0_3] : memref<8x32xf32, #tpu.memory_space<vmem>>, vector<8x32xf32>
    %cst = arith.constant dense<0.000000e+00> : vector<1x8xf32>
    %5 = tpu.matmul %3, %4, %cst {dimension_numbers = #tpu.dot_dimension_numbers<[1], [1], [0], [0], [0, 0, 1, 0], [], []>} : vector<1x32xf32>, vector<8x32xf32>, vector<1x8xf32> -> vector<1x8xf32>
    %c0_4 = arith.constant 0 : index
    %c0_5 = arith.constant 0 : index
    %6 = vector.load %arg4[%c0_4, %c0_5] : memref<1x1xf32, #tpu.memory_space<vmem>>, vector<1x1xf32>
    %cst_6 = arith.constant dense<0xFF800000> : vector<1xf32>
    %7 = vector.multi_reduction <maximumf>, %5, %cst_6 [1] : vector<1x8xf32> to vector<1xf32>
    %8 = vector.shape_cast %7 : vector<1xf32> to vector<1x1xf32>
    %9 = arith.maximumf %6, %8 : vector<1x1xf32>
    %10 = arith.subf %6, %9 : vector<1x1xf32>
    %11 = math.exp %10 : vector<1x1xf32>
    %12 = vector.broadcast %9 : vector<1x1xf32> to vector<1x8xf32>
    %13 = arith.subf %5, %12 : vector<1x8xf32>
    %14 = math.exp %13 : vector<1x8xf32>
    %c0_7 = arith.constant 0 : index
    %c0_8 = arith.constant 0 : index
    %15 = vector.load %arg5[%c0_7, %c0_8] : memref<1x1xf32, #tpu.memory_space<vmem>>, vector<1x1xf32>
    %16 = arith.mulf %11, %15 : vector<1x1xf32>
    %cst_9 = arith.constant dense<0.000000e+00> : vector<1xf32>
    %17 = vector.multi_reduction <add>, %14, %cst_9 [1] : vector<1x8xf32> to vector<1xf32>
    %18 = vector.shape_cast %17 : vector<1xf32> to vector<1x1xf32>
    %19 = arith.addf %16, %18 : vector<1x1xf32>
    %c0_10 = arith.constant 0 : index
    %c0_11 = arith.constant 0 : index
    %20 = vector.load %arg5[%c0_10, %c0_11] : memref<1x1xf32, #tpu.memory_space<vmem>>, vector<1x1xf32>
    tpu.vector_store %arg5[%c0_10, %c0_11], %19 {strides = array<i32>} : memref<1x1xf32, #tpu.memory_space<vmem>>, vector<1x1xf32>,
    %c0_12 = arith.constant 0 : index
    %c0_13 = arith.constant 0 : index
    %21 = vector.load %arg6[%c0_12, %c0_13] : memref<1x32xf32, #tpu.memory_space<vmem>>, vector<1x32xf32>
    %22 = vector.broadcast %11 : vector<1x1xf32> to vector<1x32xf32>
    %23 = arith.mulf %22, %21 : vector<1x32xf32>
    %cst_14 = arith.constant dense<0.000000e+00> : vector<1x32xf32>
    %24 = tpu.matmul %14, %4, %cst_14 {dimension_numbers = #tpu.dot_dimension_numbers<[1], [0], [0], [1], [0, 0, 1, 1], [], []>} : vector<1x8xf32>, vector<8x32xf32>, vector<1x32xf32> -> vector<1x32xf32>
    %25 = arith.addf %23, %24 : vector<1x32xf32>
    %c0_15 = arith.constant 0 : index
    %c0_16 = arith.constant 0 : index
    %26 = vector.load %arg6[%c0_15, %c0_16] : memref<1x32xf32, #tpu.memory_space<vmem>>, vector<1x32xf32>
    tpu.vector_store %arg6[%c0_15, %c0_16], %25 {strides = array<i32>} : memref<1x32xf32, #tpu.memory_space<vmem>>, vector<1x32xf32>,
    %c0_17 = arith.constant 0 : index
    %c0_18 = arith.constant 0 : index
    %27 = vector.load %arg4[%c0_17, %c0_18] : memref<1x1xf32, #tpu.memory_space<vmem>>, vector<1x1xf32>
    tpu.vector_store %arg4[%c0_17, %c0_18], %9 {strides = array<i32>} : memref<1x1xf32, #tpu.memory_space<vmem>>, vector<1x1xf32>,
    %c0_i32_19 = arith.constant 0 : i32
    %28 = arith.cmpi eq, %arg0, %c0_i32_19 : i32
    %29 = arith.extui %28 : i1 to i32
    %c0_i32_20 = arith.constant 0 : i32
    %30 = arith.cmpi ne, %29, %c0_i32_20 : i32
    scf.if %30 {
      %c0_21 = arith.constant 0 : index
      %c0_22 = arith.constant 0 : index
      %31 = vector.load %arg5[%c0_21, %c0_22] : memref<1x1xf32, #tpu.memory_space<vmem>>, vector<1x1xf32>
      %32 = tpu.reciprocal %31 {approx = true} : vector<1x1xf32> -> vector<1x1xf32>
      %c0_23 = arith.constant 0 : index
      %c0_24 = arith.constant 0 : index
      %33 = vector.load %arg6[%c0_23, %c0_24] : memref<1x32xf32, #tpu.memory_space<vmem>>, vector<1x32xf32>
      %34 = vector.broadcast %32 : vector<1x1xf32> to vector<1x32xf32>
      %35 = arith.mulf %33, %34 : vector<1x32xf32>
      %c0_25 = arith.constant 0 : index
      %c0_26 = arith.constant 0 : index
      %36 = vector.load %arg3[%c0_25, %c0_26] : memref<1x32xf32, #tpu.memory_space<vmem>>, vector<1x32xf32>
      tpu.vector_store %arg3[%c0_25, %c0_26], %35 {strides = array<i32>} : memref<1x32xf32, #tpu.memory_space<vmem>>, vector<1x32xf32>,
    } else {
    }
    return
  }
  func.func @transform_0(%arg0: i32) -> (i32, i32) {
    %c0_i32 = arith.constant 0 : i32
    %c0_i32_0 = arith.constant 0 : i32
    %c0_i32_1 = arith.constant 0 : i32
    return %c0_i32, %c0_i32_0 : i32, i32
  }
  func.func @transform_1(%arg0: i32) -> (i32, i32) {
    %c0_i32 = arith.constant 0 : i32
    %c0_i32_0 = arith.constant 0 : i32
    return %arg0, %c0_i32 : i32, i32
  }
  func.func @transform_2(%arg0: i32) -> (i32, i32) {
    %c0_i32 = arith.constant 0 : i32
    %c0_i32_0 = arith.constant 0 : i32
    %c0_i32_1 = arith.constant 0 : i32
    return %c0_i32, %c0_i32_0 : i32, i32
  }
}

</mosaic_0001>

<llo_original>
// kernel: tpu_custom_call.1
$region0: #{tpu_custom_call.1}
  #allocation0 [shape = 'u32[]', space=smem, size = 0x4, offset = 0x4, fixed_abs, tag = 'smem constant byte address 0x4 - core index']
  #allocation1 [shape = 'u32[72,128]{1,0:T(1,128)}', space=vmem, size = 0x9000, scoped, tag = 'internal scratch']
  #allocation2 [shape = 'f32[1,1]{1,0:T(1,128)}', space=vmem, size = 0x200, scoped, tag = 'scratch operand']
  #allocation3 [shape = 'f32[1,1]{1,0:T(1,128)}', space=vmem, size = 0x200, scoped, tag = 'scratch operand']
  #allocation4 [shape = 'f32[1,32]{1,0:T(1,128)}', space=vmem, size = 0x200, scoped, tag = 'scratch operand']
  %s0 = inlined_call_operand.hbm [shape: f32[1,32], index: 0, kind: input, shape index: {}]
  %s1 = inlined_call_operand.hbm [shape: f32[8,32], index: 1, kind: input, shape index: {}]
  %s2 = inlined_call_operand.hbm [shape: f32[1,32], index: 2, kind: output, shape index: {}]
  %s3 = sld [smem:[#allocation0]]
  $region34: #{tpu_custom_call.1} parent=0
    _
  %s5 = ssub.s32 1, %s3
  %s6 = scalar_select 0, %s5, %s3
  $region1: #{tpu_custom_call.1} parent=0
    #allocation5 [shape = 'u8[512]{0}', space=vmem, size = 0x400, scoped, tag = 'input window, operand 0, single buffered']
    #allocation6 [shape = 's32[1]{0}', space=sflag, size = 0x4, scoped, tag = 'scoped memory for tpu_custom_call.1']
    #allocation7 [shape = 's32[1]{0}', space=sflag, size = 0x4, scoped, tag = 'scoped memory for tpu_custom_call.1']
    #allocation8 [shape = 'u8[4096]{0}', space=vmem, size = 0x1000, scoped, tag = 'input window, operand 1, single buffered']
    #allocation9 [shape = 's32[1]{0}', space=sflag, size = 0x4, scoped, tag = 'scoped memory for tpu_custom_call.1']
    #allocation10 [shape = 'u8[512]{0}', space=vmem, size = 0x400, scoped, tag = 'output window, operand 0, single buffered']
    %7 = vsyncpa [#allocation6], 0
    %8 = vsyncpa [#allocation9], 0
    %9 = vsyncpa [#allocation7], 0
    // Predicated region
    $region2: #{tpu_custom_call.1} parent=1 // pred_check
      _
    $region3: #{tpu_custom_call.1} parent=1 // pred_check_branch
      %11 = sbr.rel (0) target = $region5
    $region4: #{tpu_custom_call.1} parent=1 // pred_region
      %13 = vsyncadd [#allocation6], 0
      %s15 = sshll.u32 %s0, 4
      %s16 = int_to_ptr.hbm [resolvable:$true] %s15
      %s17 = sshll.u32 [#allocation5], 4
      %s18 = int_to_ptr.vmem [resolvable:$true] %s17
      %20 = dma.hbm_to_vmem [thread:$0]  %s16, 16, %s18, [#allocation6]
    $region5: #{tpu_custom_call.1} parent=1 // pred_fallthru
      _
    // Predicated region
    $region6: #{tpu_custom_call.1} parent=1 // pred_check
      _
    $region7: #{tpu_custom_call.1} parent=1 // pred_check_branch
      %22 = sbr.rel (0) target = $region9
    $region8: #{tpu_custom_call.1} parent=1 // pred_region
      %24 = vsyncadd [#allocation9], 0
      %s26 = sshll.u32 %s1, 4
      %s27 = int_to_ptr.hbm [resolvable:$true] %s26
      %s28 = sshll.u32 [#allocation8], 4
      %s29 = int_to_ptr.vmem [resolvable:$true] %s28
      %31 = dma.hbm_to_vmem [thread:$0]  %s27, 128, %s29, [#allocation9]
    $region9: #{tpu_custom_call.1} parent=1 // pred_fallthru
      _
    // Predicated region
    $region10: #{tpu_custom_call.1} parent=1 // pred_check
      _
    $region11: #{tpu_custom_call.1} parent=1 // pred_check_branch
      %33 = sbr.rel (0) target = $region13
    $region12: #{tpu_custom_call.1} parent=1 // pred_region
      %35 = dma.done [#allocation6], 16
    $region13: #{tpu_custom_call.1} parent=1 // pred_fallthru
      _
    // Predicated region
    $region14: #{tpu_custom_call.1} parent=1 // pred_check
      _
    $region15: #{tpu_custom_call.1} parent=1 // pred_check_branch
      %37 = sbr.rel (0) target = $region17
    $region16: #{tpu_custom_call.1} parent=1 // pred_region
      %39 = dma.done [#allocation9], 128
    $region17: #{tpu_custom_call.1} parent=1 // pred_fallthru
      _
    %p40 = scmp.eq.s32.totalorder 0, 0
    // Predicated region
    $region18: #{tpu_custom_call.1} parent=1 // pred_check
      %p41 = pneg %p40
    $region19: #{tpu_custom_call.1} parent=1 // pred_check_branch
      %43 = sbr.rel (%p41) target = $region21
    $region20: #{tpu_custom_call.1} parent=1 // pred_region
      %vm44 = vcmask 0
      %45 = vst.msk [vmem:[#allocation2] sm:$0x1] %vm44, -inf
      %46 = vst.msk [vmem:[#allocation3] sm:$0x1] %vm44, 0.0
      %vm47 = vcmask 253952
      %48 = vst.msk [vmem:[#allocation4] sm:$0x1] %vm47, 0.0
    $region21: #{tpu_custom_call.1} parent=1 // pred_fallthru
      _
    %v49 = vld [vmem:[#allocation5] sm:$0x1]
    %v50 = vld [vmem:[#allocation8] sm:$0xff]
    %vm51 = vcmask 261120
    %v53 = vsel %vm51, %v49, 0
    %v56 = vsel %vm51, %v50, 0
    %58 = vmatpush.xpose.msra.mxu0 0.0
    %59 = vmatpush.xpose.msra.mxu0 0.0
    %60 = vmatpush.xpose.msra.mxu0 0.0
    %61 = vmatpush.xpose.msra.mxu0 0.0
    %62 = vmatpush.xpose.msra.mxu0 0.0
    %63 = vmatpush.xpose.msra.mxu0 0.0
    %64 = vmatpush.xpose.msra.mxu0 0.0
    %65 = vmatpush.xpose.msra.mxu0 0.0
    %66 = vmatpush.xpose.msra.mxu0 0.0
    %67 = vmatpush.xpose.msra.mxu0 0.0
    %68 = vmatpush.xpose.msra.mxu0 0.0
    %69 = vmatpush.xpose.msra.mxu0 0.0
    %70 = vmatpush.xpose.msra.mxu0 0.0
    %71 = vmatpush.xpose.msra.mxu0 0.0
    %72 = vmatpush.xpose.msra.mxu0 0.0
    %73 = vmatpush.xpose.msra.mxu0 %v56
    %74 = vmatmul.f32.gmra.mxu0 %v53
    %v75 = vpop.f32.mrf.mxu0
    %v76 = vadd.f32 0.0, %v75
    %77 = vdwg.mxu0
    %v78 = vld [vmem:[#allocation2] sm:$0x1]
    %vm79 = vcmask 57344
    %v80 = vsel %vm79, %v76, -inf
    %81 = vmax.xlane.f32.xlu0 %v80
    %v82 = vpop.xlane.xlu0 %81
    %v83 = vmax.f32 %v78, %v82
    %v84 = vsub.f32 %v78, %v83
    %v85 = vmul.f32 %v84, 1.442695
    %v86 = vpow.pop %v85
    %88 = vset.pattern.permute.xlu0 0
    %89 = vperm.xlu0 %88, %v83
    %v90 = vpop.permute.xlu0 %89
    %v92 = vperm.slane %v90, 0
    %v93 = vsub.f32 %v76, %v92
    %v94 = vmul.f32 %v93, 1.442695
    %v95 = vpow.pop %v94
    %v96 = vld [vmem:[#allocation3] sm:$0x1]
    %v97 = vmul.f32 %v86, %v96
    %v98 = vsel %vm79, %v95, 0.0
    %99 = vadd.xlane.f32.xlu0 %v98
    %v100 = vpop.xlane.xlu0 %99
    %v101 = vadd.f32 %v97, %v100
    %vm102 = vcmask 0
    %103 = vst.msk [vmem:[#allocation3] sm:$0x1] %vm102, %v101
    %v104 = vld [vmem:[#allocation4] sm:$0x1]
    %106 = vset.pattern.permute.xlu0 0
    %107 = vperm.xlu0 %106, %v86
    %v108 = vpop.permute.xlu0 %107
    %v110 = vperm.slane %v108, 0
    %v111 = vmul.f32 %v110, %v104
    %vm112 = vcmask 64512
    %v114 = vsel %vm112, %v95, 0
    %116 = vmatpush.msra.mxu0 0.0
    %117 = vmatpush.msra.mxu0 0.0
    %118 = vmatpush.msra.mxu0 0.0
    %119 = vmatpush.msra.mxu0 0.0
    %120 = vmatpush.msra.mxu0 0.0
    %121 = vmatpush.msra.mxu0 0.0
    %122 = vmatpush.msra.mxu0 0.0
    %123 = vmatpush.msra.mxu0 0.0
    %124 = vmatpush.msra.mxu0 0.0
    %125 = vmatpush.msra.mxu0 0.0
    %126 = vmatpush.msra.mxu0 0.0
    %127 = vmatpush.msra.mxu0 0.0
    %128 = vmatpush.msra.mxu0 0.0
    %129 = vmatpush.msra.mxu0 0.0
    %130 = vmatpush.msra.mxu0 0.0
    %131 = vmatpush.msra.mxu0 %v50
    %132 = vmatmul.f32.gmra.mxu0 %v114
    %v133 = vpop.f32.mrf.mxu0
    %v134 = vadd.f32 0.0, %v133
    %135 = vdwg.mxu0
    %v136 = vadd.f32 %v111, %v134
    %vm137 = vcmask 253952
    %138 = vst.msk [vmem:[#allocation4] sm:$0x1] %vm137, %v136
    %139 = vst.msk [vmem:[#allocation2] sm:$0x1] %vm102, %v83
    // Predicated region
    $region22: #{tpu_custom_call.1} parent=1 // pred_check
      %p140 = pneg %p40
    $region23: #{tpu_custom_call.1} parent=1 // pred_check_branch
      %142 = sbr.rel (%p140) target = $region25
    $region24: #{tpu_custom_call.1} parent=1 // pred_region
      %v143 = vld [vmem:[#allocation3] sm:$0x1]
      %v144 = vrcp.pop %v143
      %v145 = vld [vmem:[#allocation4] sm:$0x1]
      %147 = vset.pattern.permute.xlu0 0
      %148 = vperm.xlu0 %147, %v144
      %v149 = vpop.permute.xlu0 %148
      %v151 = vperm.slane %v149, 0
      %v152 = vmul.f32 %v145, %v151
      %153 = vst.msk [vmem:[#allocation10] sm:$0x1] %vm137, %v152
    $region25: #{tpu_custom_call.1} parent=1 // pred_fallthru
      _
    // Predicated region
    $region26: #{tpu_custom_call.1} parent=1 // pred_check
      _
    $region27: #{tpu_custom_call.1} parent=1 // pred_check_branch
      %155 = sbr.rel (0) target = $region29
    $region28: #{tpu_custom_call.1} parent=1 // pred_region
      %157 = vsyncadd [#allocation7], 0
      %s159 = sshll.u32 [#allocation10], 4
      %s160 = int_to_ptr.vmem [resolvable:$true] %s159
      %s161 = sshll.u32 %s2, 4
      %s162 = int_to_ptr.hbm [resolvable:$true] %s161
      %164 = dma.vmem_to_hbm [thread:$0]  %s160, 16, %s162, [#allocation7]
    $region29: #{tpu_custom_call.1} parent=1 // pred_fallthru
      _
    // Predicated region
    $region30: #{tpu_custom_call.1} parent=1 // pred_check
      _
    $region31: #{tpu_custom_call.1} parent=1 // pred_check_branch
      %166 = sbr.rel (0) target = $region33
    $region32: #{tpu_custom_call.1} parent=1 // pred_region
      %168 = dma.done [#allocation7], 16
    $region33: #{tpu_custom_call.1} parent=1 // pred_fallthru
      _
    %169 = vsyncpa [#allocation6], 1
    %170 = vsyncpa [#allocation9], 1
    %171 = vsyncpa [#allocation7], 1

</llo_original>
